<compile_context>
chip_gen: v7x
topology: tpu7x:2x2x1
jax: 0.10.0
libtpu: 0.0.40
codegen_flags: <defaults>
</compile_context>

<pallas_src>
import jax
import jax.numpy as jnp
from jax.experimental import pallas as pl
from jax.experimental.pallas import tpu as pltpu


# ----------------------------------------------------------------------------
# Single-step forward: out = x @ W.T + u @ C.T   (one gridless pallas_call)
# ----------------------------------------------------------------------------
def _forward_kernel(x_ref, u_ref, wt_ref, ct_ref, o_ref):
    acc = jnp.dot(x_ref[...], wt_ref[...], preferred_element_type=jnp.float32)
    acc = acc + jnp.dot(u_ref[...], ct_ref[...], preferred_element_type=jnp.float32)
    o_ref[...] = acc.astype(o_ref.dtype)


@jax.jit
def _forward(x, u, wt, ct):
    B, dx = x.shape
    du = u.shape[1]
    d_out = wt.shape[1]
    # True (unpadded) cost of this op.
    flops = 2 * B * (dx + du) * d_out
    bytes_accessed = 4 * (B * dx + B * du + dx * d_out + du * d_out + B * d_out)
    vmem = pl.BlockSpec(memory_space=pltpu.MemorySpace.VMEM)
    return pl.pallas_call(
        _forward_kernel,
        out_shape=jax.ShapeDtypeStruct((B, d_out), x.dtype),
        in_specs=[vmem, vmem, vmem, vmem],
        out_specs=vmem,
        cost_estimate=pl.CostEstimate(
            flops=flops, transcendentals=0, bytes_accessed=bytes_accessed),
    )(x, u.astype(x.dtype), wt, ct)


# ----------------------------------------------------------------------------
# Fused ODE-solver path: explicit-Euler rollout with the step loop inside ONE
# pallas_call.  Weights + state stay resident in VMEM across all steps.
# ----------------------------------------------------------------------------
def _euler_kernel(dt_ref, x0_ref, u_ref, wt_ref, ct_ref, traj_ref, state_ref):
    step = pl.program_id(0)

    @pl.when(step == 0)
    def _():
        state_ref[...] = x0_ref[...].astype(jnp.float32)

    x = state_ref[...]                       # resident state (B, d)
    u = u_ref[0].astype(jnp.float32)         # this step's stimulus (B, du)
    dxdt = jnp.dot(x, wt_ref[...].astype(jnp.float32),
                   preferred_element_type=jnp.float32)
    dxdt = dxdt + jnp.dot(u, ct_ref[...].astype(jnp.float32),
                          preferred_element_type=jnp.float32)
    x_new = x + dt_ref[0] * dxdt
    state_ref[...] = x_new
    traj_ref[0] = x_new.astype(traj_ref.dtype)


@jax.jit
def _euler_trajectory(x0, us, dt, wt, ct):
    n_steps, B, du = us.shape
    dx, d_out = wt.shape
    flops = 2 * n_steps * B * (dx + du) * d_out
    bytes_accessed = 4 * (B * dx + n_steps * B * du + dx * d_out + du * d_out
                          + n_steps * B * d_out)
    return pl.pallas_call(
        _euler_kernel,
        out_shape=jax.ShapeDtypeStruct((n_steps, B, d_out), x0.dtype),
        grid=(n_steps,),
        in_specs=[
            pl.BlockSpec(memory_space=pltpu.MemorySpace.SMEM),      # dt (1,)
            pl.BlockSpec((B, dx), lambda s: (0, 0)),                # x0 (resident)
            pl.BlockSpec((1, B, du), lambda s: (s, 0, 0)),          # per-step u
            pl.BlockSpec((dx, d_out), lambda s: (0, 0)),            # W.T (resident)
            pl.BlockSpec((du, d_out), lambda s: (0, 0)),            # C.T (resident)
        ],
        out_specs=pl.BlockSpec((1, B, d_out), lambda s: (s, 0, 0)),
        scratch_shapes=[pltpu.VMEM((B, dx), jnp.float32)],          # carried state
        compiler_params=pltpu.CompilerParams(
            dimension_semantics=("arbitrary",)),                    # sequential steps
        cost_estimate=pl.CostEstimate(
            flops=flops, transcendentals=0, bytes_accessed=bytes_accessed),
    )(dt, x0, us, wt, ct)


# ----------------------------------------------------------------------------
# Module-like wrappers
# ----------------------------------------------------------------------------
class LinearODEF:
    """JAX/Pallas port of PyTorch LinearODEF: forward(x, u, t) = x @ W.T + u @ C.T."""

    def __init__(self, W, C):
        W = jnp.asarray(W)
        C = jnp.asarray(C)
        assert W.shape[0] == C.shape[0], "W and C must share the output dimension"
        self.W, self.C = W, C
        # Transposed ONCE (contraction-major for the MXU) and reused every call.
        self.wt = W.T                     # (d_x, d_out)
        self.ct = C.astype(W.dtype).T     # (d_u, d_out)

    def forward(self, x, u, t=None):
        del t  # unused in the reference forward
        return _forward(x, u, self.wt, self.ct)

    __call__ = forward

    def integrate_euler(self, x0, us, dt):
        """Fused multi-step path: n_steps explicit-Euler steps inside one
        pallas_call.  Returns the state trajectory, shape (n_steps, B, d)."""
        assert self.wt.shape[0] == self.wt.shape[1], (
            "Euler rollout needs a square dynamics matrix (d_out == d_x)")
        dt_arr = jnp.asarray([dt], dtype=jnp.float32)
        return _euler_trajectory(x0, us, dt_arr, self.wt, self.ct)


def linear_odef(x, u, t, W, C):
    """One-shot functional API matching LinearODEF.forward(x, u, t)."""
    del t  # unused in the reference forward
    return _forward(x, u, jnp.asarray(W).T, jnp.asarray(C).T)


if __name__ == "__main__":
    key = jax.random.PRNGKey(0)
    k_w, k_c, k_x, k_u, k_us = jax.random.split(key, 5)

    # Small shapes consistent with the module: state dim 4, stimulus dim 3,
    # batch 8, 16 solver steps.
    d_x, d_u, d_out, batch, n_steps = 4, 3, 4, 8, 16
    dt = 0.05

    W = jax.random.normal(k_w, (d_out, d_x), dtype=jnp.float32)   # lin.weight
    C = jax.random.normal(k_c, (d_out, d_u), dtype=jnp.float32)   # sti.weight

    x = jax.random.normal(k_x, (batch, d_x), dtype=jnp.float32)
    u = jax.random.normal(k_u, (batch, d_u), dtype=jnp.float32)
    t = jnp.zeros((batch, 1), dtype=jnp.float32)                  # unused, as in PyTorch

    odef = LinearODEF(W, C)

    # --- single forward step (PyTorch LinearODEF.forward semantics) ---------
    out = jax.block_until_ready(odef(x, u, t))
    ref = x @ W.T + u @ C.T
    assert out.shape == (batch, d_out)
    assert jnp.allclose(out, ref, atol=1e-5, rtol=1e-5)

    # One-shot functional API too.
    out2 = jax.block_until_ready(linear_odef(x, u, t, W, C))
    assert jnp.allclose(out2, ref, atol=1e-5, rtol=1e-5)

    # --- fused ODE-solver path: step loop inside one pallas_call ------------
    us = jax.random.normal(k_us, (n_steps, batch, d_u), dtype=jnp.float32)
    traj = jax.block_until_ready(odef.integrate_euler(x, us, dt))

    def ref_step(carry, u_i):
        nxt = carry + dt * (carry @ W.T + u_i @ C.T)
        return nxt, nxt

    _, traj_ref = jax.lax.scan(ref_step, x, us)
    assert traj.shape == (n_steps, batch, d_out)
    assert jnp.allclose(traj, traj_ref, atol=1e-3, rtol=1e-3)

    print("KERNEL_OK")
</pallas_src>

<mosaic_0001>
module attributes {stable_mosaic.version = 11 : i64} {
  func.func @_forward_kernel(%arg0: memref<8x4xf32, #tpu.memory_space<vmem>>, %arg1: memref<8x3xf32, #tpu.memory_space<vmem>>, %arg2: memref<4x4xf32, #tpu.memory_space<vmem>>, %arg3: memref<3x4xf32, #tpu.memory_space<vmem>>, %arg4: memref<8x4xf32, #tpu.memory_space<vmem>>) attributes {dimension_semantics = [], scalar_prefetch = 0 : i64, scratch_operands = 0 : i64, tpu.core_type = #tpu.core_type<tc>} {
    %c0 = arith.constant 0 : index
    %c0_0 = arith.constant 0 : index
    %0 = vector.load %arg0[%c0, %c0_0] : memref<8x4xf32, #tpu.memory_space<vmem>>, vector<8x4xf32>
    %c0_1 = arith.constant 0 : index
    %c0_2 = arith.constant 0 : index
    %1 = vector.load %arg2[%c0_1, %c0_2] : memref<4x4xf32, #tpu.memory_space<vmem>>, vector<4x4xf32>
    %cst = arith.constant dense<0.000000e+00> : vector<8x4xf32>
    %2 = tpu.matmul %0, %1, %cst {dimension_numbers = #tpu.dot_dimension_numbers<[1], [0], [0], [1], [0, 0, 1, 1], [], []>} : vector<8x4xf32>, vector<4x4xf32>, vector<8x4xf32> -> vector<8x4xf32>
    %c0_3 = arith.constant 0 : index
    %c0_4 = arith.constant 0 : index
    %3 = vector.load %arg1[%c0_3, %c0_4] : memref<8x3xf32, #tpu.memory_space<vmem>>, vector<8x3xf32>
    %c0_5 = arith.constant 0 : index
    %c0_6 = arith.constant 0 : index
    %4 = vector.load %arg3[%c0_5, %c0_6] : memref<3x4xf32, #tpu.memory_space<vmem>>, vector<3x4xf32>
    %cst_7 = arith.constant dense<0.000000e+00> : vector<8x4xf32>
    %5 = tpu.matmul %3, %4, %cst_7 {dimension_numbers = #tpu.dot_dimension_numbers<[1], [0], [0], [1], [0, 0, 1, 1], [], []>} : vector<8x3xf32>, vector<3x4xf32>, vector<8x4xf32> -> vector<8x4xf32>
    %6 = arith.addf %2, %5 : vector<8x4xf32>
    %c0_8 = arith.constant 0 : index
    %c0_9 = arith.constant 0 : index
    %7 = vector.load %arg4[%c0_8, %c0_9] : memref<8x4xf32, #tpu.memory_space<vmem>>, vector<8x4xf32>
    tpu.vector_store %arg4[%c0_8, %c0_9], %6 {strides = array<i32>} : memref<8x4xf32, #tpu.memory_space<vmem>>, vector<8x4xf32>,
    return
  }
}

</mosaic_0001>

<llo_original>
// kernel: _forward.1
$region0: #{_forward.1}
  #allocation0 [shape = 'u32[]', space=smem, size = 0x4, offset = 0x4, fixed_abs, tag = 'smem constant byte address 0x4 - core index']
  #allocation1 [shape = 'u32[144,128]{1,0:T(1,128)}', space=vmem, size = 0x12000, scoped, tag = 'internal scratch']
  %s0 = inlined_call_operand.vmem [shape: f32[8,4], index: 0, kind: input, shape index: {}]
  %s1 = inlined_call_operand.vmem [shape: f32[8,3], index: 1, kind: input, shape index: {}]
  %s2 = inlined_call_operand.vmem [shape: f32[4,4], index: 2, kind: input, shape index: {}]
  %s3 = inlined_call_operand.vmem [shape: f32[3,4], index: 3, kind: input, shape index: {}]
  %s4 = inlined_call_operand.vmem [shape: f32[8,4], index: 4, kind: output, shape index: {}]
  %s5 = sld [smem:[#allocation0]]
  $region26: #{_forward.1} parent=0
    _
  %s7 = ssub.s32 1, %s5
  %s8 = scalar_select 0, %s7, %s5
  // Predicated region
  $region2: #{_forward.1} parent=0 // pred_check
    _
  $region3: #{_forward.1} parent=0 // pred_check_branch
    %10 = sbr.rel (0) target = $region5
  $region4: #{_forward.1} parent=0 // pred_region
    _
  $region5: #{_forward.1} parent=0 // pred_fallthru
    _
  // Predicated region
  $region6: #{_forward.1} parent=0 // pred_check
    _
  $region7: #{_forward.1} parent=0 // pred_check_branch
    %12 = sbr.rel (0) target = $region9
  $region8: #{_forward.1} parent=0 // pred_region
    _
  $region9: #{_forward.1} parent=0 // pred_fallthru
    _
  // Predicated region
  $region10: #{_forward.1} parent=0 // pred_check
    _
  $region11: #{_forward.1} parent=0 // pred_check_branch
    %14 = sbr.rel (0) target = $region13
  $region12: #{_forward.1} parent=0 // pred_region
    _
  $region13: #{_forward.1} parent=0 // pred_fallthru
    _
  // Predicated region
  $region14: #{_forward.1} parent=0 // pred_check
    _
  $region15: #{_forward.1} parent=0 // pred_check_branch
    %16 = sbr.rel (0) target = $region17
  $region16: #{_forward.1} parent=0 // pred_region
    _
  $region17: #{_forward.1} parent=0 // pred_fallthru
    _
  %v17 = vld [vmem:[%s0] sm:$0xff]
  %v18 = vld [vmem:[%s2] sm:$0xf]
  %v19 = vld [vmem:[%s1] sm:$0xff]
  %v20 = vld [vmem:[%s3] sm:$0x7]
  %vm21 = vcmask 23552
  %v23 = vsel %vm21, %v19, 0
  %vm25 = vcmask 1042432
  %v27 = vsel %vm25, %v20, 0
  %29 = vmatprep.subr.mxu0 0.0
  %30 = vmatpush1.msra.mxu0 %v27
  %31 = vmatprep.subr.mxu0 0.0
  %32 = vmatpush1.msra.mxu0 0.0
  %33 = vmatprep.subr.mxu0 0.0
  %34 = vmatpush1.msra.mxu0 0.0
  %35 = vmatprep.subr.mxu0 0.0
  %36 = vmatpush1.msra.mxu0 0.0
  %37 = vmatprep.subr.mxu0 0.0
  %38 = vmatpush1.msra.mxu0 0.0
  %39 = vmatprep.subr.mxu0 0.0
  %40 = vmatpush1.msra.mxu0 0.0
  %41 = vmatprep.subr.mxu0 0.0
  %42 = vmatpush1.msra.mxu0 0.0
  %43 = vmatprep.subr.mxu0 0.0
  %44 = vmatpush1.msra.mxu0 0.0
  %45 = vmatprep.subr.mxu0 0.0
  %46 = vmatpush1.msra.mxu0 0.0
  %47 = vmatprep.subr.mxu0 0.0
  %48 = vmatpush1.msra.mxu0 0.0
  %49 = vmatprep.subr.mxu0 0.0
  %50 = vmatpush1.msra.mxu0 0.0
  %51 = vmatprep.subr.mxu0 0.0
  %52 = vmatpush1.msra.mxu0 0.0
  %53 = vmatprep.subr.mxu0 0.0
  %54 = vmatpush1.msra.mxu0 0.0
  %55 = vmatprep.subr.mxu0 0.0
  %56 = vmatpush1.msra.mxu0 0.0
  %57 = vmatprep.subr.mxu0 0.0
  %58 = vmatpush1.msra.mxu0 0.0
  %59 = vmatprep.subr.mxu0 0.0
  %60 = vmatpush1.msra.mxu0 0.0
  %61 = vmatprep.subr.mxu0 0.0
  %62 = vmatpush1.msra.mxu0 0.0
  %63 = vmatprep.subr.mxu0 0.0
  %64 = vmatpush1.msra.mxu0 0.0
  %65 = vmatprep.subr.mxu0 0.0
  %66 = vmatpush1.msra.mxu0 0.0
  %67 = vmatprep.subr.mxu0 0.0
  %68 = vmatpush1.msra.mxu0 0.0
  %69 = vmatprep.subr.mxu0 0.0
  %70 = vmatpush1.msra.mxu0 0.0
  %71 = vmatprep.subr.mxu0 0.0
  %72 = vmatpush1.msra.mxu0 0.0
  %73 = vmatprep.subr.mxu0 0.0
  %74 = vmatpush1.msra.mxu0 0.0
  %75 = vmatprep.subr.mxu0 0.0
  %76 = vmatpush1.msra.mxu0 0.0
  %77 = vmatprep.subr.mxu0 0.0
  %78 = vmatpush1.msra.mxu0 0.0
  %79 = vmatprep.subr.mxu0 0.0
  %80 = vmatpush1.msra.mxu0 0.0
  %81 = vmatprep.subr.mxu0 0.0
  %82 = vmatpush1.msra.mxu0 0.0
  %83 = vmatprep.subr.mxu0 0.0
  %84 = vmatpush1.msra.mxu0 0.0
  %85 = vmatprep.subr.mxu0 0.0
  %86 = vmatpush1.msra.mxu0 0.0
  %87 = vmatprep.subr.mxu0 0.0
  %88 = vmatpush1.msra.mxu0 0.0
  %89 = vmatprep.subr.mxu0 0.0
  %90 = vmatpush1.msra.mxu0 0.0
  %91 = vmatprep.subr.mxu0 0.0
  %92 = vmatpush1.msra.mxu0 0.0
  %93 = vmatprep.mubr.f32.mxu0 0.0
  %94 = vmatmul.mubr.f32.gmra.mrb[0].mxu0 %v23
  %v95 = vpop.f32.mrb[0].mxu0
  %v96 = vadd.f32 0.0, %v95
  %v97 = vpop.f32.mrb[0].mxu0
  %98 = vdwg.mxu0
  %vm99 = vcmask 31744
  %v101 = vsel %vm99, %v17, 0
  %vm103 = vcmask 1043456
  %v105 = vsel %vm103, %v18, 0
  %107 = vmatprep.subr.mxu0 0.0
  %108 = vmatpush1.msra.mxu0 %v105
  %109 = vmatprep.subr.mxu0 0.0
  %110 = vmatpush1.msra.mxu0 0.0
  %111 = vmatprep.subr.mxu0 0.0
  %112 = vmatpush1.msra.mxu0 0.0
  %113 = vmatprep.subr.mxu0 0.0
  %114 = vmatpush1.msra.mxu0 0.0
  %115 = vmatprep.subr.mxu0 0.0
  %116 = vmatpush1.msra.mxu0 0.0
  %117 = vmatprep.subr.mxu0 0.0
  %118 = vmatpush1.msra.mxu0 0.0
  %119 = vmatprep.subr.mxu0 0.0
  %120 = vmatpush1.msra.mxu0 0.0
  %121 = vmatprep.subr.mxu0 0.0
  %122 = vmatpush1.msra.mxu0 0.0
  %123 = vmatprep.subr.mxu0 0.0
  %124 = vmatpush1.msra.mxu0 0.0
  %125 = vmatprep.subr.mxu0 0.0
  %126 = vmatpush1.msra.mxu0 0.0
  %127 = vmatprep.subr.mxu0 0.0
  %128 = vmatpush1.msra.mxu0 0.0
  %129 = vmatprep.subr.mxu0 0.0
  %130 = vmatpush1.msra.mxu0 0.0
  %131 = vmatprep.subr.mxu0 0.0
  %132 = vmatpush1.msra.mxu0 0.0
  %133 = vmatprep.subr.mxu0 0.0
  %134 = vmatpush1.msra.mxu0 0.0
  %135 = vmatprep.subr.mxu0 0.0
  %136 = vmatpush1.msra.mxu0 0.0
  %137 = vmatprep.subr.mxu0 0.0
  %138 = vmatpush1.msra.mxu0 0.0
  %139 = vmatprep.subr.mxu0 0.0
  %140 = vmatpush1.msra.mxu0 0.0
  %141 = vmatprep.subr.mxu0 0.0
  %142 = vmatpush1.msra.mxu0 0.0
  %143 = vmatprep.subr.mxu0 0.0
  %144 = vmatpush1.msra.mxu0 0.0
  %145 = vmatprep.subr.mxu0 0.0
  %146 = vmatpush1.msra.mxu0 0.0
  %147 = vmatprep.subr.mxu0 0.0
  %148 = vmatpush1.msra.mxu0 0.0
  %149 = vmatprep.subr.mxu0 0.0
  %150 = vmatpush1.msra.mxu0 0.0
  %151 = vmatprep.subr.mxu0 0.0
  %152 = vmatpush1.msra.mxu0 0.0
  %153 = vmatprep.subr.mxu0 0.0
  %154 = vmatpush1.msra.mxu0 0.0
  %155 = vmatprep.subr.mxu0 0.0
  %156 = vmatpush1.msra.mxu0 0.0
  %157 = vmatprep.subr.mxu0 0.0
  %158 = vmatpush1.msra.mxu0 0.0
  %159 = vmatprep.subr.mxu0 0.0
  %160 = vmatpush1.msra.mxu0 0.0
  %161 = vmatprep.subr.mxu0 0.0
  %162 = vmatpush1.msra.mxu0 0.0
  %163 = vmatprep.subr.mxu0 0.0
  %164 = vmatpush1.msra.mxu0 0.0
  %165 = vmatprep.subr.mxu0 0.0
  %166 = vmatpush1.msra.mxu0 0.0
  %167 = vmatprep.subr.mxu0 0.0
  %168 = vmatpush1.msra.mxu0 0.0
  %169 = vmatprep.subr.mxu0 0.0
  %170 = vmatpush1.msra.mxu0 0.0
  %171 = vmatprep.mubr.f32.mxu0 0.0
  %172 = vmatmul.mubr.f32.gmra.mrb[0].mxu0 %v101
  %v173 = vpop.f32.mrb[0].mxu0
  %v174 = vadd.f32 %v96, %v173
  %v175 = vpop.f32.mrb[0].mxu0
  %176 = vdwg.mxu0
  %177 = vst.msk [vmem:[%s4] sm:$0xff] %vm99, %v174
  // Predicated region
  $region18: #{_forward.1} parent=0 // pred_check
    _
  $region19: #{_forward.1} parent=0 // pred_check_branch
    %179 = sbr.rel (0) target = $region21
  $region20: #{_forward.1} parent=0 // pred_region
    _
  $region21: #{_forward.1} parent=0 // pred_fallthru
    _
  // Predicated region
  $region22: #{_forward.1} parent=0 // pred_check
    _
  $region23: #{_forward.1} parent=0 // pred_check_branch
    %181 = sbr.rel (0) target = $region25
  $region24: #{_forward.1} parent=0 // pred_region
    _
  $region25: #{_forward.1} parent=0 // pred_fallthru
    _

</llo_original>
